<compile_context>
chip_gen: v7x
topology: tpu7x:2x2x1
jax: 0.10.0
libtpu: 0.0.40
codegen_flags: <defaults>
</compile_context>

<pallas_src>
import functools

import jax
import jax.numpy as jnp
from jax.experimental import pallas as pl
from jax.experimental.pallas import tpu as pltpu


def _hybrid_kernel(thetas_ref, o_ref, *, n_qubits, n_lo):
    """Per-tile measurement probabilities.

    thetas_ref: (B_tile, n_qubits)  rotation angles for this batch tile
    o_ref:      (B_tile, S_tile)    output probabilities, S_tile = 2**n_lo
    Grid: (B // B_tile, S // S_tile); axis 1 tile index supplies the high bits
    of the basis-state index, the in-tile lane iota supplies the low bits.
    """
    j = pl.program_id(1)                                  # tile index along S (high bits)
    thetas = thetas_ref[...]                              # (Bt, n)
    Bt = thetas.shape[0]
    St = o_ref.shape[1]

    half = thetas * 0.5
    c = jnp.cos(half)
    s = jnp.sin(half)
    c2 = c * c                                            # P(measure 0) per qubit, (Bt, n)
    d = s * s - c2                                        # s2 - c2 (strength reduction)

    n_hi = n_qubits - n_lo

    # ---- high-qubit factor: bits fixed for the whole tile -> (Bt, 1), computed once ----
    hi = None
    for q in range(n_hi):
        p = n_qubits - 1 - q                              # bit position (MSB-first), p >= n_lo
        bit = ((j >> (p - n_lo)) & 1).astype(jnp.float32) # scalar 0/1 from grid index
        fac = c2[:, q:q + 1] + d[:, q:q + 1] * bit        # (Bt, 1)
        hi = fac if hi is None else hi * fac

    # ---- low-qubit factor: bits vary along the lane dimension of the tile ----
    # n_qubits is small & static -> unrolled VPU product (for very large n prefer the
    # MXU log-sum formulation; not needed at these sizes).
    i_idx = jax.lax.broadcasted_iota(jnp.int32, (Bt, St), 1)   # in-tile state index
    lo = None
    for q in range(n_hi, n_qubits):
        p = n_qubits - 1 - q                              # bit position, p < n_lo
        bit = ((i_idx >> p) & 1).astype(jnp.float32)      # (Bt, St)
        fac = c2[:, q:q + 1] + d[:, q:q + 1] * bit        # (Bt, St)
        lo = fac if lo is None else lo * fac

    if lo is None:                                        # degenerate: S_tile == 1
        out = jnp.broadcast_to(hi, (Bt, St))
    elif hi is None:                                      # whole state index fits in one tile
        out = lo
    else:
        out = hi * lo                                     # split-half outer-product combine
    o_ref[...] = out.astype(o_ref.dtype)


def _batch_tile(B, cap=256):
    """Largest batch tile <= cap that keeps the BlockSpec legal (divides B; multiple of 8
    when it is a proper sub-block)."""
    if B <= cap:
        return B
    start = cap - (cap % 8)
    for t in range(start, 0, -8):
        if B % t == 0:
            return t
    return B


def hybrid_forward(thetas, n_qubits, *, max_s_tile=2048, max_b_tile=256):
    """JAX wrapper: tiles over (batch, basis-states) and invokes the Pallas kernel."""
    B = thetas.shape[0]
    S = 2 ** n_qubits

    # S and max_s_tile are powers of two -> S_tile always divides S and is either the
    # full extent or a multiple of 128 (lane-dense, unmasked stores).
    S_tile = min(S, max_s_tile)
    n_lo = S_tile.bit_length() - 1                        # log2(S_tile)
    B_tile = _batch_tile(B, max_b_tile)
    grid = (B // B_tile, S // S_tile)

    kernel = functools.partial(_hybrid_kernel, n_qubits=n_qubits, n_lo=n_lo)
    return pl.pallas_call(
        kernel,
        out_shape=jax.ShapeDtypeStruct((B, S), jnp.float32),
        grid=grid,
        in_specs=[
            pl.BlockSpec((B_tile, n_qubits), lambda i, j: (i, 0)),
        ],
        out_specs=pl.BlockSpec((B_tile, S_tile), lambda i, j: (i, j)),
        compiler_params=pltpu.CompilerParams(
            dimension_semantics=("parallel", "parallel"),
        ),
    )(thetas.astype(jnp.float32))


def hybrid_reference(thetas, n_qubits):
    """Pure-JAX reference for correctness checking."""
    S = 2 ** n_qubits
    states = jnp.arange(S, dtype=jnp.int32)
    shifts = jnp.arange(n_qubits - 1, -1, -1, dtype=jnp.int32)        # MSB first
    bits = ((states[None, :] >> shifts[:, None]) & 1).astype(jnp.float32)  # (n, S)
    c2 = jnp.cos(thetas * 0.5) ** 2                                   # (B, n)
    s2 = jnp.sin(thetas * 0.5) ** 2
    per_q = s2[:, :, None] * bits[None, :, :] + c2[:, :, None] * (1.0 - bits[None, :, :])
    return jnp.prod(per_q, axis=1)


if __name__ == "__main__":
    # Small shapes consistent with the module: batch=2 parameter vectors, 4 qubits.
    batch = 2
    n_qubits = 4
    shots = 100          # unused numerically: kernel returns the exact shots->inf distribution
    shift = jnp.pi / 2   # parameter-shift constant (backward-pass only; unused in forward)

    key = jax.random.PRNGKey(0)
    thetas = jax.random.uniform(key, (batch, n_qubits), dtype=jnp.float32,
                                minval=0.0, maxval=2.0 * jnp.pi)

    out = hybrid_forward(thetas, n_qubits)
    out = jax.block_until_ready(out)

    ref = hybrid_reference(thetas, n_qubits)
    assert out.shape == (batch, 2 ** n_qubits)
    assert jnp.allclose(out, ref, atol=1e-5), "Pallas kernel mismatch vs reference"
    # Each row is a probability distribution over basis states.
    assert jnp.allclose(jnp.sum(out, axis=-1), 1.0, atol=1e-5)

    # Also exercise the tiled path (multi-tile grid over both axes) to validate the
    # in-kernel bit generation / split-half combine at a non-trivial size.
    b2, n2 = 16, 11                                        # S = 2048 -> grid (1, 1) at cap
    th2 = jax.random.uniform(jax.random.PRNGKey(1), (b2, n2), dtype=jnp.float32,
                             minval=0.0, maxval=2.0 * jnp.pi)
    out2 = jax.block_until_ready(hybrid_forward(th2, n2, max_s_tile=512, max_b_tile=8))
    ref2 = hybrid_reference(th2, n2)
    assert jnp.allclose(out2, ref2, atol=1e-5), "Pallas kernel mismatch vs reference (tiled)"
    assert jnp.allclose(jnp.sum(out2, axis=-1), 1.0, atol=1e-4)

    print("KERNEL_OK")
</pallas_src>

<mosaic_0001>
module attributes {stable_mosaic.version = 11 : i64} {
  func.func @_hybrid_kernel(%arg0: i32, %arg1: i32, %arg2: memref<2x4xf32, #tpu.memory_space<vmem>>, %arg3: memref<2x16xf32, #tpu.memory_space<vmem>>) attributes {dimension_semantics = [#tpu.dimension_semantics<parallel>, #tpu.dimension_semantics<parallel>], iteration_bounds = array<i64: 1, 1>, scalar_prefetch = 0 : i64, scratch_operands = 0 : i64, tpu.core_type = #tpu.core_type<tc>, window_params = [{transform_indices = @transform_0, window_bounds = array<i64: 2, 4>}, {transform_indices = @transform_1, window_bounds = array<i64: 2, 16>}]} {
    %c0 = arith.constant 0 : index
    %c0_0 = arith.constant 0 : index
    %0 = vector.load %arg2[%c0, %c0_0] : memref<2x4xf32, #tpu.memory_space<vmem>>, vector<2x4xf32>
    %cst = arith.constant 5.000000e-01 : f32
    %1 = vector.broadcast %cst : f32 to vector<2x4xf32>
    %2 = arith.mulf %0, %1 : vector<2x4xf32>
    %3 = math.cos %2 : vector<2x4xf32>
    %4 = math.sin %2 : vector<2x4xf32>
    %5 = arith.mulf %3, %3 : vector<2x4xf32>
    %6 = arith.mulf %4, %4 : vector<2x4xf32>
    %7 = arith.subf %6, %5 : vector<2x4xf32>
    %8 = tpu.iota {dimensions = array<i32: 1>} : vector<2x16xi32>
    %c3_i32 = arith.constant 3 : i32
    %9 = vector.broadcast %c3_i32 : i32 to vector<2x16xi32>
    %10 = arith.shrsi %8, %9 : vector<2x16xi32>
    %c1_i32 = arith.constant 1 : i32
    %11 = vector.broadcast %c1_i32 : i32 to vector<2x16xi32>
    %12 = arith.andi %10, %11 : vector<2x16xi32>
    %13 = arith.sitofp %12 : vector<2x16xi32> to vector<2x16xf32>
    %14 = vector.extract_strided_slice %5 {offsets = [0, 0], sizes = [2, 1], strides = [1, 1]} : vector<2x4xf32> to vector<2x1xf32>
    %15 = vector.extract_strided_slice %7 {offsets = [0, 0], sizes = [2, 1], strides = [1, 1]} : vector<2x4xf32> to vector<2x1xf32>
    %16 = vector.broadcast %15 : vector<2x1xf32> to vector<2x16xf32>
    %17 = arith.mulf %16, %13 : vector<2x16xf32>
    %18 = vector.broadcast %14 : vector<2x1xf32> to vector<2x16xf32>
    %19 = arith.addf %18, %17 : vector<2x16xf32>
    %c2_i32 = arith.constant 2 : i32
    %20 = vector.broadcast %c2_i32 : i32 to vector<2x16xi32>
    %21 = arith.shrsi %8, %20 : vector<2x16xi32>
    %c1_i32_1 = arith.constant 1 : i32
    %22 = vector.broadcast %c1_i32_1 : i32 to vector<2x16xi32>
    %23 = arith.andi %21, %22 : vector<2x16xi32>
    %24 = arith.sitofp %23 : vector<2x16xi32> to vector<2x16xf32>
    %25 = vector.extract_strided_slice %5 {offsets = [0, 1], sizes = [2, 1], strides = [1, 1]} : vector<2x4xf32> to vector<2x1xf32>
    %26 = vector.extract_strided_slice %7 {offsets = [0, 1], sizes = [2, 1], strides = [1, 1]} : vector<2x4xf32> to vector<2x1xf32>
    %27 = vector.broadcast %26 : vector<2x1xf32> to vector<2x16xf32>
    %28 = arith.mulf %27, %24 : vector<2x16xf32>
    %29 = vector.broadcast %25 : vector<2x1xf32> to vector<2x16xf32>
    %30 = arith.addf %29, %28 : vector<2x16xf32>
    %31 = arith.mulf %19, %30 : vector<2x16xf32>
    %c1_i32_2 = arith.constant 1 : i32
    %32 = vector.broadcast %c1_i32_2 : i32 to vector<2x16xi32>
    %33 = arith.shrsi %8, %32 : vector<2x16xi32>
    %c1_i32_3 = arith.constant 1 : i32
    %34 = vector.broadcast %c1_i32_3 : i32 to vector<2x16xi32>
    %35 = arith.andi %33, %34 : vector<2x16xi32>
    %36 = arith.sitofp %35 : vector<2x16xi32> to vector<2x16xf32>
    %37 = vector.extract_strided_slice %5 {offsets = [0, 2], sizes = [2, 1], strides = [1, 1]} : vector<2x4xf32> to vector<2x1xf32>
    %38 = vector.extract_strided_slice %7 {offsets = [0, 2], sizes = [2, 1], strides = [1, 1]} : vector<2x4xf32> to vector<2x1xf32>
    %39 = vector.broadcast %38 : vector<2x1xf32> to vector<2x16xf32>
    %40 = arith.mulf %39, %36 : vector<2x16xf32>
    %41 = vector.broadcast %37 : vector<2x1xf32> to vector<2x16xf32>
    %42 = arith.addf %41, %40 : vector<2x16xf32>
    %43 = arith.mulf %31, %42 : vector<2x16xf32>
    %c0_i32 = arith.constant 0 : i32
    %44 = vector.broadcast %c0_i32 : i32 to vector<2x16xi32>
    %45 = arith.shrsi %8, %44 : vector<2x16xi32>
    %c1_i32_4 = arith.constant 1 : i32
    %46 = vector.broadcast %c1_i32_4 : i32 to vector<2x16xi32>
    %47 = arith.andi %45, %46 : vector<2x16xi32>
    %48 = arith.sitofp %47 : vector<2x16xi32> to vector<2x16xf32>
    %49 = vector.extract_strided_slice %5 {offsets = [0, 3], sizes = [2, 1], strides = [1, 1]} : vector<2x4xf32> to vector<2x1xf32>
    %50 = vector.extract_strided_slice %7 {offsets = [0, 3], sizes = [2, 1], strides = [1, 1]} : vector<2x4xf32> to vector<2x1xf32>
    %51 = vector.broadcast %50 : vector<2x1xf32> to vector<2x16xf32>
    %52 = arith.mulf %51, %48 : vector<2x16xf32>
    %53 = vector.broadcast %49 : vector<2x1xf32> to vector<2x16xf32>
    %54 = arith.addf %53, %52 : vector<2x16xf32>
    %55 = arith.mulf %43, %54 : vector<2x16xf32>
    %c0_5 = arith.constant 0 : index
    %c0_6 = arith.constant 0 : index
    %56 = vector.load %arg3[%c0_5, %c0_6] : memref<2x16xf32, #tpu.memory_space<vmem>>, vector<2x16xf32>
    tpu.vector_store %arg3[%c0_5, %c0_6], %55 {strides = array<i32>} : memref<2x16xf32, #tpu.memory_space<vmem>>, vector<2x16xf32>,
    return
  }
  func.func @transform_0(%arg0: i32, %arg1: i32) -> (i32, i32) {
    %c0_i32 = arith.constant 0 : i32
    %c0_i32_0 = arith.constant 0 : i32
    return %arg0, %c0_i32 : i32, i32
  }
  func.func @transform_1(%arg0: i32, %arg1: i32) -> (i32, i32) {
    %c0_i32 = arith.constant 0 : i32
    return %arg0, %arg1 : i32, i32
  }
}

</mosaic_0001>

<llo_original>
// kernel: tpu_custom_call.1
$region0: #{tpu_custom_call.1}
  #allocation0 [shape = 'u32[]', space=smem, size = 0x4, offset = 0x4, fixed_abs, tag = 'smem constant byte address 0x4 - core index']
  #allocation1 [shape = 'u32[144,128]{1,0:T(1,128)}', space=vmem, size = 0x12000, scoped, tag = 'internal scratch']
  %s0 = inlined_call_operand.hbm [shape: f32[2,4], index: 0, kind: input, shape index: {}]
  %s1 = inlined_call_operand.hbm [shape: f32[2,16], index: 1, kind: output, shape index: {}]
  %s2 = sld [smem:[#allocation0]]
  $region18: #{tpu_custom_call.1} parent=0
    _
  %s4 = ssub.s32 1, %s2
  %s5 = scalar_select 0, %s4, %s2
  $region1: #{tpu_custom_call.1} parent=0
    #allocation2 [shape = 'u8[1024]{0}', space=vmem, size = 0x400, scoped, tag = 'input window, operand 0, single buffered']
    #allocation3 [shape = 's32[1]{0}', space=sflag, size = 0x4, scoped, tag = 'scoped memory for tpu_custom_call.1']
    #allocation4 [shape = 's32[1]{0}', space=sflag, size = 0x4, scoped, tag = 'scoped memory for tpu_custom_call.1']
    #allocation5 [shape = 'u8[1024]{0}', space=vmem, size = 0x400, scoped, tag = 'output window, operand 0, single buffered']
    %6 = vsyncpa [#allocation3], 0
    %7 = vsyncpa [#allocation4], 0
    // Predicated region
    $region2: #{tpu_custom_call.1} parent=1 // pred_check
      _
    $region3: #{tpu_custom_call.1} parent=1 // pred_check_branch
      %9 = sbr.rel (0) target = $region5
    $region4: #{tpu_custom_call.1} parent=1 // pred_region
      %s11 = ssub.s32 32, 32
      %12 = vsyncadd [#allocation3], %s11
      %s14 = sshll.u32 [#allocation2], 4
      %s15 = int_to_ptr.vmem [resolvable:$true] %s14
      %17 = dma.hbm_to_vmem [thread:$0]  %s0, 32, %s15, [#allocation3]
    $region5: #{tpu_custom_call.1} parent=1 // pred_fallthru
      _
    // Predicated region
    $region6: #{tpu_custom_call.1} parent=1 // pred_check
      _
    $region7: #{tpu_custom_call.1} parent=1 // pred_check_branch
      %19 = sbr.rel (0) target = $region9
    $region8: #{tpu_custom_call.1} parent=1 // pred_region
      %20 = dma.done [#allocation3], 32
    $region9: #{tpu_custom_call.1} parent=1 // pred_fallthru
      _
    %v21 = vld [vmem:[#allocation2] sm:$0x3]
    %v22 = vmul.f32 %v21, 0.5
    %v23 = vand.u32 2147483647, %v22
    %vm24 = vcmp.le.f32.partialorder %v23, 0.7853982
    %vm25 = vcmp.lt.s32.totalorder %v22, 0
    %v26 = vand.u32 %v22, 2139095040
    %v27 = vshrl.u32 %v26, 23
    %v28 = vsub.s32 %v27, 127
    %v29 = vand.u32 2147483647, %v22
    %v30 = vand.u32 %v29, 8388607
    %v31 = vor.u32 %v30, 8388608
    %v32 = vsub.s32 0, %v31
    %v33 = vadd.s32 %v28, 1
    %vm34 = vcmp.gt.s32.totalorder %v33, 0
    %v35 = vsel %vm34, %v33, 0
    %v36 = vshrl.u32 %v35, 5
    %v37 = vand.u32 %v35, 31
    %v38 = vsub.s32 32, %v37
    %v39 = vshrl.u32 683565275, %v38
    %v40 = vshll.u32 683565275, %v37
    %v41 = vshrl.u32 2475754826, %v38
    %v42 = vor.u32 %v40, %v41
    %v43 = vshll.u32 2475754826, %v37
    %v44 = vshrl.u32 2131351028, %v38
    %v45 = vor.u32 %v43, %v44
    %v46 = vshll.u32 2131351028, %v37
    %v47 = vshrl.u32 2102212464, %v38
    %v48 = vor.u32 %v46, %v47
    %v49 = vshll.u32 2102212464, %v37
    %v50 = vshrl.u32 920167782, %v38
    %v51 = vor.u32 %v49, %v50
    %v52 = vshll.u32 920167782, %v37
    %v53 = vshrl.u32 1326507024, %v38
    %v54 = vor.u32 %v52, %v53
    %vm55 = vcmp.lt.s32.totalorder %v36, 1
    %vm56 = vcmp.lt.s32.totalorder %v36, 2
    %vm57 = vcmp.lt.s32.totalorder %v36, 3
    %vm58 = vcmp.lt.s32.totalorder %v36, 4
    %v59 = vsel %vm55, %v39, %v42
    %v60 = vsel %vm58, %v48, 2102212464
    %v61 = vsel %vm57, %v45, %v60
    %v62 = vsel %vm56, %v59, %v61
    %v63 = vsel %vm55, %v42, %v45
    %v64 = vsel %vm58, %v51, 920167782
    %v65 = vsel %vm57, %v48, %v64
    %v66 = vsel %vm56, %v63, %v65
    %v67 = vsel %vm55, %v45, %v48
    %v68 = vsel %vm58, %v54, 1326507024
    %v69 = vsel %vm57, %v51, %v68
    %v70 = vsel %vm56, %v67, %v69
    %v71 = vshll.u32 %v31, 8
    %v72 = vmul.u32.u64.compose %v71, %v70
    %v73 = vextract.low.u32 %v72
    %v74 = vextract.high.u32 %v72
    %v75 = vmul.u32.u64.compose %v71, %v66
    %v76 = vextract.low.u32 %v75
    %v77 = vextract.high.u32 %v75
    %v78 = vmul.u32 %v71, %v62
    %v79 = vadd.s32 %v74, %v76
    %vm80 = vc.u32 %v74, %v76
    %v81 = vadd.s32 %v77, 1
    %v82 = vsel %vm80, %v81, %v77
    %v83 = vadd.s32 %v78, %v82
    %v84 = vadd.s32 %v83, 536870912
    %v85 = vshrl.u32 %v84, 30
    %v86 = vshll.u32 %v85, 30
    %v87 = vsub.s32 %v83, %v86
    %vm88 = vcmp.lt.s32.totalorder %v87, 0
    %v89 = vsub.s32 0, %v87
    %v90 = vsel %vm88, %v89, %v87
    %v91 = vclz %v90
    %v92 = vsub.s32 %v91, 2
    %vm93 = vcmp.gt.s32.totalorder 0, %v92
    %v94 = vsel %vm93, 0, %v92
    %v95 = vsub.s32 32, %v94
    %v96 = vshll.u32 %v87, %v94
    %v97 = vshrl.u32 %v79, %v95
    %v98 = vor.u32 %v96, %v97
    %v99 = vsub.s32 4294967266, %v94
    %v100 = vadd.s32 %v99, 127
    %v101 = vshll.u32 %v100, 23
    %v102 = vor.u32 4788187, %v101
    %v103 = vand.u32 2147483647, %v102
    %v105 = vcvt.s32.f32 %v98
    %v106 = vmul.f32 %v105, %v103
    %v107 = vxor.u32 %v106, 2147483648
    %v108 = vsel %vm25, %v107, %v106
    %v109 = vsub.s32 4, %v85
    %v110 = vsel %vm25, %v109, %v85
    %v111 = vsel %vm24, %v22, %v108
    %v112 = vsel %vm24, 0, %v110
    %v113 = vcosq.f32.pop %v111
    %v114 = vsinq.f32.pop %v111
    %vm115 = vweird.f32 %v22
    %v116 = vand.u32 %v112, 3
    %vm117 = vcmp.lt.s32.totalorder %v116, 2
    %vm118 = vcmp.eq.s32.totalorder %v116, 0
    %v119 = vxor.u32 %v114, 2147483648
    %v120 = vsel %vm118, %v113, %v119
    %vm121 = vcmp.eq.s32.totalorder %v116, 2
    %v122 = vxor.u32 %v113, 2147483648
    %v123 = vsel %vm121, %v122, %v114
    %v124 = vsel %vm117, %v120, %v123
    %v125 = vsel %vm115, nan, %v124
    %v126 = vand.u32 2147483647, %v22
    %vm127 = vcmp.le.f32.partialorder %v126, 0.7853982
    %vm128 = vcmp.lt.s32.totalorder %v22, 0
    %v129 = vand.u32 %v22, 2139095040
    %v130 = vshrl.u32 %v129, 23
    %v131 = vsub.s32 %v130, 127
    %v132 = vand.u32 2147483647, %v22
    %v133 = vand.u32 %v132, 8388607
    %v134 = vor.u32 %v133, 8388608
    %v135 = vsub.s32 0, %v134
    %v136 = vadd.s32 %v131, 1
    %vm137 = vcmp.gt.s32.totalorder %v136, 0
    %v138 = vsel %vm137, %v136, 0
    %v139 = vshrl.u32 %v138, 5
    %v140 = vand.u32 %v138, 31
    %v141 = vsub.s32 32, %v140
    %v142 = vshrl.u32 683565275, %v141
    %v143 = vshll.u32 683565275, %v140
    %v144 = vshrl.u32 2475754826, %v141
    %v145 = vor.u32 %v143, %v144
    %v146 = vshll.u32 2475754826, %v140
    %v147 = vshrl.u32 2131351028, %v141
    %v148 = vor.u32 %v146, %v147
    %v149 = vshll.u32 2131351028, %v140
    %v150 = vshrl.u32 2102212464, %v141
    %v151 = vor.u32 %v149, %v150
    %v152 = vshll.u32 2102212464, %v140
    %v153 = vshrl.u32 920167782, %v141
    %v154 = vor.u32 %v152, %v153
    %v155 = vshll.u32 920167782, %v140
    %v156 = vshrl.u32 1326507024, %v141
    %v157 = vor.u32 %v155, %v156
    %vm158 = vcmp.lt.s32.totalorder %v139, 1
    %vm159 = vcmp.lt.s32.totalorder %v139, 2
    %vm160 = vcmp.lt.s32.totalorder %v139, 3
    %vm161 = vcmp.lt.s32.totalorder %v139, 4
    %v162 = vsel %vm158, %v142, %v145
    %v163 = vsel %vm161, %v151, 2102212464
    %v164 = vsel %vm160, %v148, %v163
    %v165 = vsel %vm159, %v162, %v164
    %v166 = vsel %vm158, %v145, %v148
    %v167 = vsel %vm161, %v154, 920167782
    %v168 = vsel %vm160, %v151, %v167
    %v169 = vsel %vm159, %v166, %v168
    %v170 = vsel %vm158, %v148, %v151
    %v171 = vsel %vm161, %v157, 1326507024
    %v172 = vsel %vm160, %v154, %v171
    %v173 = vsel %vm159, %v170, %v172
    %v174 = vshll.u32 %v134, 8
    %v175 = vmul.u32.u64.compose %v174, %v173
    %v176 = vextract.low.u32 %v175
    %v177 = vextract.high.u32 %v175
    %v178 = vmul.u32.u64.compose %v174, %v169
    %v179 = vextract.low.u32 %v178
    %v180 = vextract.high.u32 %v178
    %v181 = vmul.u32 %v174, %v165
    %v182 = vadd.s32 %v177, %v179
    %vm183 = vc.u32 %v177, %v179
    %v184 = vadd.s32 %v180, 1
    %v185 = vsel %vm183, %v184, %v180
    %v186 = vadd.s32 %v181, %v185
    %v187 = vadd.s32 %v186, 536870912
    %v188 = vshrl.u32 %v187, 30
    %v189 = vshll.u32 %v188, 30
    %v190 = vsub.s32 %v186, %v189
    %vm191 = vcmp.lt.s32.totalorder %v190, 0
    %v192 = vsub.s32 0, %v190
    %v193 = vsel %vm191, %v192, %v190
    %v194 = vclz %v193
    %v195 = vsub.s32 %v194, 2
    %vm196 = vcmp.gt.s32.totalorder 0, %v195
    %v197 = vsel %vm196, 0, %v195
    %v198 = vsub.s32 32, %v197
    %v199 = vshll.u32 %v190, %v197
    %v200 = vshrl.u32 %v182, %v198
    %v201 = vor.u32 %v199, %v200
    %v202 = vsub.s32 4294967266, %v197
    %v203 = vadd.s32 %v202, 127
    %v204 = vshll.u32 %v203, 23
    %v205 = vor.u32 4788187, %v204
    %v206 = vand.u32 2147483647, %v205
    %v208 = vcvt.s32.f32 %v201
    %v209 = vmul.f32 %v208, %v206
    %v210 = vxor.u32 %v209, 2147483648
    %v211 = vsel %vm128, %v210, %v209
    %v212 = vsub.s32 4, %v188
    %v213 = vsel %vm128, %v212, %v188
    %v214 = vsel %vm127, %v22, %v211
    %v215 = vsel %vm127, 0, %v213
    %v216 = vcosq.f32.pop %v214
    %v217 = vsinq.f32.pop %v214
    %vm218 = vweird.f32 %v22
    %v219 = vadd.s32 %v215, 3
    %v220 = vand.u32 %v219, 3
    %vm221 = vcmp.lt.s32.totalorder %v220, 2
    %vm222 = vcmp.eq.s32.totalorder %v220, 0
    %v223 = vxor.u32 %v217, 2147483648
    %v224 = vsel %vm222, %v216, %v223
    %vm225 = vcmp.eq.s32.totalorder %v220, 2
    %v226 = vxor.u32 %v216, 2147483648
    %v227 = vsel %vm225, %v226, %v217
    %v228 = vsel %vm221, %v224, %v227
    %v229 = vsel %vm218, nan, %v228
    %v230 = vmul.f32 %v125, %v125
    %v231 = vmul.f32 %v229, %v229
    %v232 = vsub.f32 %v231, %v230
    %v233 = vlaneseq
    %v234 = vand.u32 %v233, 127
    %v235 = vshra.s32 %v234, 3
    %v236 = vand.u32 %v235, 1
    %v237 = vcvt.s32.f32 %v236
    %239 = vset.pattern.permute.xlu0 0
    %240 = vperm.xlu0 %239, %v232
    %v241 = vpop.permute.xlu0 %240
    %v243 = vmul.f32 %v241, %v237
    %245 = vset.pattern.permute.xlu0 0
    %246 = vperm.xlu0 %245, %v230
    %v247 = vpop.permute.xlu0 %246
    %v249 = vadd.f32 %v247, %v243
    %v250 = vshra.s32 %v234, 2
    %v251 = vand.u32 %v250, 1
    %v252 = vcvt.s32.f32 %v251
    %253 = vset.pattern.permute.xlu0 1
    %254 = vperm.xlu0 %253, %v232
    %v255 = vpop.permute.xlu0 %254
    %v257 = vmul.f32 %v255, %v252
    %258 = vset.pattern.permute.xlu0 1
    %259 = vperm.xlu0 %258, %v230
    %v260 = vpop.permute.xlu0 %259
    %v262 = vadd.f32 %v260, %v257
    %v263 = vmul.f32 %v249, %v262
    %v264 = vshra.s32 %v234, 1
    %v265 = vand.u32 %v264, 1
    %v266 = vcvt.s32.f32 %v265
    %267 = vset.pattern.permute.xlu0 2
    %268 = vperm.xlu0 %267, %v232
    %v269 = vpop.permute.xlu0 %268
    %v271 = vmul.f32 %v269, %v266
    %272 = vset.pattern.permute.xlu0 2
    %273 = vperm.xlu0 %272, %v230
    %v274 = vpop.permute.xlu0 %273
    %v276 = vadd.f32 %v274, %v271
    %v277 = vmul.f32 %v263, %v276
    %v278 = vand.u32 %v234, 1
    %v279 = vcvt.s32.f32 %v278
    %280 = vset.pattern.permute.xlu0 3
    %281 = vperm.xlu0 %280, %v232
    %v282 = vpop.permute.xlu0 %281
    %v284 = vmul.f32 %v282, %v279
    %285 = vset.pattern.permute.xlu0 3
    %286 = vperm.xlu0 %285, %v230
    %v287 = vpop.permute.xlu0 %286
    %v289 = vadd.f32 %v287, %v284
    %v290 = vmul.f32 %v277, %v289
    %vm291 = vcmask 123904
    %292 = vst.msk [vmem:[#allocation5] sm:$0x3] %vm291, %v290
    // Predicated region
    $region10: #{tpu_custom_call.1} parent=1 // pred_check
      _
    $region11: #{tpu_custom_call.1} parent=1 // pred_check_branch
      %294 = sbr.rel (0) target = $region13
    $region12: #{tpu_custom_call.1} parent=1 // pred_region
      %s296 = ssub.s32 32, 32
      %297 = vsyncadd [#allocation4], %s296
      %s299 = sshll.u32 [#allocation5], 4
      %s300 = int_to_ptr.vmem [resolvable:$true] %s299
      %302 = dma.vmem_to_hbm [thread:$0]  %s300, 32, %s1, [#allocation4]
    $region13: #{tpu_custom_call.1} parent=1 // pred_fallthru
      _
    // Predicated region
    $region14: #{tpu_custom_call.1} parent=1 // pred_check
      _
    $region15: #{tpu_custom_call.1} parent=1 // pred_check_branch
      %304 = sbr.rel (0) target = $region17
    $region16: #{tpu_custom_call.1} parent=1 // pred_region
      %305 = dma.done [#allocation4], 32
    $region17: #{tpu_custom_call.1} parent=1 // pred_fallthru
      _
    %306 = vsyncpa [#allocation3], 1
    %307 = vsyncpa [#allocation4], 1

</llo_original>
